<compile_context>
chip_gen: v6e
topology: v6e:2x2x1
jax: 0.10.0
libtpu: 0.0.40
codegen_flags: <defaults>
</compile_context>

<pallas_src>
import functools
import math

import jax
import jax.numpy as jnp
from jax import lax
from jax.experimental import pallas as pl
from jax.experimental.pallas import tpu as pltpu

_LANES = 128
_TARGET_BLOCK_BYTES = 4 << 20      # ~4 MiB blocks: amortizes per-step cost at v7x bandwidth
_VMEM_LIMIT_BYTES = 32 << 20       # explicit scoped-VMEM limit, safe on v5e/v6e/v7x
_NUM_CORES = 2                     # v7x has 2 TCs; extra leading axis is harmless on 1-TC chips
_ACC_ROWS = 64                     # target width of the resident reduction accumulator


def _sublane_multiple(dtype):
    # f32 -> 8, bf16/f16 -> 16, int8/fp8 -> 32 (native sublane packing multiples).
    return max(8, 32 // jnp.dtype(dtype).itemsize)


def _pick_row_tile(rows, sub, itemsize):
    target_rows = max(sub, _TARGET_BLOCK_BYTES // (_LANES * itemsize))
    rt = min(rows, target_rows)
    return max(sub, (rt // sub) * sub)


# ---------------------------------------------------------------------------
# Kernel 1: full-tensor abs-sum reduction (for one-time step_size initialization)
# Grid = (cores, blocks_per_core); each core owns a resident (acc_rows, 128) f32
# accumulator block and only issues VPU adds per step.
# ---------------------------------------------------------------------------
def _abs_sum_kernel(x_ref, acc_ref, *, rows, row_tile, n_blocks, acc_rows):
    c = pl.program_id(0)
    i = pl.program_id(1)
    blk = c * pl.num_programs(1) + i

    @pl.when(i == 0)
    def _():
        acc_ref[...] = jnp.zeros_like(acc_ref)

    def accumulate(a):
        # Reduce block rows down to (acc_rows, 128) with plain vector adds (stays on the
        # VPU, short dependent chain, hidden under the input DMA).  The cross-lane
        # reduction happens once, outside, in JAX.
        acc_ref[...] += a.reshape(row_tile // acc_rows, acc_rows, _LANES).sum(axis=0)[None]

    has_tail = (rows % row_tile) != 0          # static
    n_full = n_blocks - 1 if has_tail else n_blocks

    @pl.when(blk < n_full)
    def _():
        # Full blocks: no mask ops at all.
        accumulate(jnp.abs(x_ref[...].astype(jnp.float32)))

    if has_tail:
        @pl.when(blk == n_blocks - 1)
        def _():
            # Final partial block: mask the out-of-bounds rows (their contents are
            # unspecified) so they do not pollute the sum.
            a = jnp.abs(x_ref[...].astype(jnp.float32))
            gid = blk * row_tile + lax.broadcasted_iota(
                jnp.int32, (row_tile, _LANES), 0)
            accumulate(jnp.where(gid < rows, a, 0.0))


def _abs_sum(x2d, rows, row_tile):
    n_blocks = pl.cdiv(rows, row_tile)
    bpc = pl.cdiv(n_blocks, _NUM_CORES)            # blocks per core
    acc_rows = math.gcd(row_tile, _ACC_ROWS)       # multiple of 8, divides row_tile

    kernel = functools.partial(_abs_sum_kernel, rows=rows, row_tile=row_tile,
                               n_blocks=n_blocks, acc_rows=acc_rows)
    acc = pl.pallas_call(
        kernel,
        out_shape=jax.ShapeDtypeStruct((_NUM_CORES, acc_rows, _LANES), jnp.float32),
        grid=(_NUM_CORES, bpc),
        in_specs=[pl.BlockSpec(
            (row_tile, _LANES),
            # Clamp so duplicated / overhanging steps never index past the last block;
            # their contribution is suppressed by the pl.when guards in the kernel.
            lambda c, i: (jnp.minimum(c * bpc + i, n_blocks - 1), 0))],
        out_specs=pl.BlockSpec((1, acc_rows, _LANES), lambda c, i: (c, 0, 0)),
        compiler_params=pltpu.CompilerParams(
            dimension_semantics=("parallel", "arbitrary"),
            vmem_limit_bytes=_VMEM_LIMIT_BYTES),
    )(x2d)
    return jnp.sum(acc)


# ---------------------------------------------------------------------------
# Kernel 2: elementwise LSQ quantize:
#   q = (round(clip(x / scale - bias, 0, num_bins)) + bias) * scale
# computed as  round(clip(x * inv_scale - bias, 0, num_bins)) * scale + bias*scale
# with scale / inv_scale / bias*scale scalar-prefetched (SMEM); multiply, don't divide.
# ---------------------------------------------------------------------------
def _lsq_quantize_kernel(scales_ref, x_ref, o_ref, *, num_bins, bias):
    scale = scales_ref[0]        # step_size + eps
    inv_scale = scales_ref[1]    # 1 / (step_size + eps)
    x = x_ref[...].astype(jnp.float32)
    if bias == 0.0:
        # symm=False: statically drop both bias ops.
        v = jnp.round(jnp.clip(x * inv_scale, 0.0, float(num_bins)))
        o_ref[...] = (v * scale).astype(o_ref.dtype)
    else:
        bias_scale = scales_ref[2]   # bias * scale, precomputed
        t = x * inv_scale - bias
        v = jnp.round(jnp.clip(t, 0.0, float(num_bins)))   # round-half-to-even == torch.round
        o_ref[...] = (v * scale + bias_scale).astype(o_ref.dtype)


def _lsq_quantize(x2d, rows, scale, row_tile, num_bins, bias):
    scale = jnp.asarray(scale, jnp.float32)
    scales = jnp.stack([scale, 1.0 / scale, jnp.float32(bias) * scale]).astype(jnp.float32)
    kernel = functools.partial(_lsq_quantize_kernel, num_bins=num_bins, bias=bias)
    return pl.pallas_call(
        kernel,
        out_shape=jax.ShapeDtypeStruct((rows, _LANES), x2d.dtype),
        grid_spec=pltpu.PrefetchScalarGridSpec(
            num_scalar_prefetch=1,
            grid=(pl.cdiv(rows, row_tile),),
            in_specs=[pl.BlockSpec((row_tile, _LANES), lambda i, s: (i, 0))],
            out_specs=pl.BlockSpec((row_tile, _LANES), lambda i, s: (i, 0)),
        ),
        compiler_params=pltpu.CompilerParams(
            dimension_semantics=("parallel",),
            vmem_limit_bytes=_VMEM_LIMIT_BYTES),
    )(scales, x2d)


# ---------------------------------------------------------------------------
# Module wrapper (plain JAX glue): lane-dense view, parameter init, reshape back
# ---------------------------------------------------------------------------
class LSQPerTensor:
    """JAX/Pallas port of image_classification.quantize.LSQPerTensor (forward only).

    NOTE: stateful `initialized` mutation and the symm=False host-sync check are
    eager-mode only; wrap/refactor before putting this under jax.jit.
    """

    def __init__(self, bits, symm=True, inputtype=""):
        self.bits = bits
        self.symm = symm
        # Deterministic init, matching Parameter(torch.tensor(1.0)).
        self.step_size = jnp.float32(1.0)
        self.initialized = False
        self.inputtype = inputtype

    def __call__(self, x):
        num_bins = 2 ** self.bits - 1
        orig_shape = x.shape
        n = x.size
        sub = _sublane_multiple(x.dtype)
        itemsize = jnp.dtype(x.dtype).itemsize
        aligned = n > 0 and (n % (sub * _LANES) == 0)

        if aligned:
            # Free (bitcast) reshape to a lane-dense slab; no pad / unpad copies.
            rows = n // _LANES
            x2d = x.reshape(rows, _LANES)
        else:
            # TODO(synk): handle the ragged tail in-kernel (masked last block) instead of
            # a pad/unpad pass; jnp.pad at least fuses the zero-pad into a single copy.
            rows = -(-n // _LANES)
            rows = -(-rows // sub) * sub
            pad = rows * _LANES - n
            x2d = jnp.pad(x.reshape(-1), (0, pad)).reshape(rows, _LANES)

        row_tile = _pick_row_tile(rows, sub, itemsize)

        if not self.initialized:
            # step_size = 2 * mean(|x|) / sqrt(num_bins); padded zeros contribute 0,
            # the mean divides by the true element count n.
            abs_sum = _abs_sum(x2d, rows, row_tile)
            self.step_size = (2.0 * (abs_sum / n) / math.sqrt(num_bins)).astype(jnp.float32)
            self.initialized = True

        if not self.symm:
            # Reference code prints the tensor and calls exit(0) in this case.
            if bool(jnp.min(x) < 0) and bool(jnp.max(x) > 0):
                raise ValueError(
                    "LSQPerTensor: signed input with symm=False (reference exits here)")

        bias = -num_bins / 2.0 if self.symm else 0.0
        scale = (self.step_size + jnp.float32(1e-7)).astype(jnp.float32)

        q2d = _lsq_quantize(x2d, rows, scale, row_tile, num_bins, bias)
        if aligned:
            return q2d.reshape(orig_shape)      # free reshape, no slice
        return q2d.reshape(-1)[:n].reshape(orig_shape)


# ---------------------------------------------------------------------------
# Pure-JAX reference for verification (same reciprocal-multiply / bias*scale
# formulation as the kernel; differs from x/scale by at most ~1 ulp pre-round).
# ---------------------------------------------------------------------------
def _reference_quantize(x, step_size, bits, symm):
    num_bins = 2 ** bits - 1
    bias = -num_bins / 2.0 if symm else 0.0
    scale = (jnp.float32(step_size) + jnp.float32(1e-7)).astype(jnp.float32)
    inv_scale = 1.0 / scale
    t = x.astype(jnp.float32) * inv_scale - bias
    v = jnp.round(jnp.clip(t, 0.0, float(num_bins)))
    return (v * scale + bias * scale).astype(x.dtype)


def _assert_quant_close(out, ref, scale, max_tie_flips=3):
    if bool(jnp.allclose(out, ref, rtol=1e-6, atol=1e-6)):
        return
    # Extremely rare round-half-to-even tie flips (XLA vs Mosaic elementwise chain) move
    # a value by exactly one quantization step; tolerate at most a couple of them.
    diff = jnp.abs(out - ref)
    bad = diff > 1e-5
    assert int(jnp.sum(bad)) <= max_tie_flips, "quantized output mismatch"
    assert bool(jnp.all(jnp.where(bad, jnp.abs(diff - scale), 0.0) <= 1e-4)), \
        "quantized output mismatch"


if __name__ == "__main__":
    key = jax.random.PRNGKey(0)
    x = jax.random.normal(key, (2, 4, 16, 16), dtype=jnp.float32)  # NCHW conv activation

    module = LSQPerTensor(bits=8, symm=True, inputtype="activation")
    out = jax.block_until_ready(module(x))

    # Verify step_size initialization (reduction kernel) against pure JAX.
    num_bins = 2 ** module.bits - 1
    step_ref = 2.0 * jnp.mean(jnp.abs(x)) / math.sqrt(num_bins)
    assert jnp.allclose(module.step_size, step_ref, rtol=1e-5, atol=1e-6), "step_size mismatch"

    # Verify elementwise quantize kernel against pure JAX using the same step_size.
    ref = _reference_quantize(x, module.step_size, module.bits, module.symm)
    assert out.shape == x.shape and out.dtype == x.dtype
    _assert_quant_close(out, ref, float(module.step_size) + 1e-7)

    # Exercise the ragged (non-lane-aligned) fallback path.
    x_r = jax.random.normal(jax.random.PRNGKey(1), (3, 5, 7), dtype=jnp.float32)
    module_r = LSQPerTensor(bits=4, symm=True)
    out_r = jax.block_until_ready(module_r(x_r))
    ref_r = _reference_quantize(x_r, module_r.step_size, module_r.bits, module_r.symm)
    assert out_r.shape == x_r.shape
    _assert_quant_close(out_r, ref_r, float(module_r.step_size) + 1e-7)

    # Exercise partial-final-block handling directly (rows=24, row_tile=16):
    # the abs-sum tail mask only runs on the last block and the 2-core split is active.
    x_p = jax.random.normal(jax.random.PRNGKey(2), (24, _LANES), dtype=jnp.float32)
    s_k = _abs_sum(x_p, 24, 16)
    assert jnp.allclose(s_k, jnp.sum(jnp.abs(x_p)), rtol=1e-4, atol=1e-3), "abs-sum mismatch"
    sc = jnp.float32(0.05)
    q_p = _lsq_quantize(x_p, 24, sc, 16, 255, -127.5)
    v_p = jnp.round(jnp.clip(x_p * (1.0 / sc) + 127.5, 0.0, 255.0))
    _assert_quant_close(q_p, v_p * sc + (-127.5) * sc, float(sc))

    # Exercise the symm=False (bias==0) static branch of the quantize kernel directly.
    x_u = jnp.abs(jax.random.normal(jax.random.PRNGKey(3), (8, _LANES), dtype=jnp.float32))
    sc_u = jnp.float32(0.02)
    q_u = _lsq_quantize(x_u, 8, sc_u, 8, 255, 0.0)
    v_u = jnp.round(jnp.clip(x_u * (1.0 / sc_u), 0.0, 255.0))
    _assert_quant_close(q_u, v_u * sc_u, float(sc_u))

    print("KERNEL_OK")
</pallas_src>

<mosaic_0001>
module attributes {stable_mosaic.version = 11 : i64} {
  func.func @_abs_sum_kernel(%arg0: i32, %arg1: i32, %arg2: memref<16x128xf32, #tpu.memory_space<vmem>>, %arg3: memref<1x16x128xf32, #tpu.memory_space<vmem>>) attributes {dimension_semantics = [#tpu.dimension_semantics<parallel>, #tpu.dimension_semantics<arbitrary>], iteration_bounds = array<i64: 2, 1>, scalar_prefetch = 0 : i64, scratch_operands = 0 : i64, tpu.core_type = #tpu.core_type<tc>, window_params = [{transform_indices = @transform_0, window_bounds = array<i64: 16, 128>}, {transform_indices = @transform_1, window_bounds = array<i64: 1, 16, 128>}]} {
    %c1_i32 = arith.constant 1 : i32
    %0 = arith.muli %arg0, %c1_i32 : i32
    %1 = arith.addi %0, %arg1 : i32
    %c0_i32 = arith.constant 0 : i32
    %2 = arith.cmpi eq, %arg1, %c0_i32 : i32
    %3 = arith.extui %2 : i1 to i32
    %c0_i32_0 = arith.constant 0 : i32
    %4 = arith.cmpi ne, %3, %c0_i32_0 : i32
    scf.if %4 {
      %cst = arith.constant 0.000000e+00 : f32
      %8 = vector.broadcast %cst : f32 to vector<1x16x128xf32>
      %c0 = arith.constant 0 : index
      %c0_3 = arith.constant 0 : index
      %c0_4 = arith.constant 0 : index
      %9 = vector.load %arg3[%c0, %c0_3, %c0_4] : memref<1x16x128xf32, #tpu.memory_space<vmem>>, vector<1x16x128xf32>
      tpu.vector_store %arg3[%c0, %c0_3, %c0_4], %8 {strides = array<i32>} : memref<1x16x128xf32, #tpu.memory_space<vmem>>, vector<1x16x128xf32>,
    } else {
    }
    %c1_i32_1 = arith.constant 1 : i32
    %5 = arith.cmpi slt, %1, %c1_i32_1 : i32
    %6 = arith.extui %5 : i1 to i32
    %c0_i32_2 = arith.constant 0 : i32
    %7 = arith.cmpi ne, %6, %c0_i32_2 : i32
    scf.if %7 {
      %c0 = arith.constant 0 : index
      %c0_3 = arith.constant 0 : index
      %8 = vector.load %arg2[%c0, %c0_3] : memref<16x128xf32, #tpu.memory_space<vmem>>, vector<16x128xf32>
      %9 = math.absf %8 : vector<16x128xf32>
      %c0_4 = arith.constant 0 : index
      %c0_5 = arith.constant 0 : index
      %c0_6 = arith.constant 0 : index
      %10 = vector.load %arg3[%c0_4, %c0_5, %c0_6] : memref<1x16x128xf32, #tpu.memory_space<vmem>>, vector<1x16x128xf32>
      %11 = vector.shape_cast %9 : vector<16x128xf32> to vector<1x16x128xf32>
      %cst = arith.constant dense<0.000000e+00> : vector<16x128xf32>
      %12 = vector.multi_reduction <add>, %11, %cst [0] : vector<1x16x128xf32> to vector<16x128xf32>
      %13 = vector.shape_cast %12 : vector<16x128xf32> to vector<1x16x128xf32>
      %14 = arith.addf %10, %13 : vector<1x16x128xf32>
      %c0_7 = arith.constant 0 : index
      %c0_8 = arith.constant 0 : index
      %c0_9 = arith.constant 0 : index
      %15 = vector.load %arg3[%c0_7, %c0_8, %c0_9] : memref<1x16x128xf32, #tpu.memory_space<vmem>>, vector<1x16x128xf32>
      tpu.vector_store %arg3[%c0_7, %c0_8, %c0_9], %14 {strides = array<i32>} : memref<1x16x128xf32, #tpu.memory_space<vmem>>, vector<1x16x128xf32>,
    } else {
    }
    return
  }
  func.func @transform_0(%arg0: i32, %arg1: i32) -> (i32, i32) {
    %c1_i32 = arith.constant 1 : i32
    %0 = arith.muli %arg0, %c1_i32 : i32
    %1 = arith.addi %0, %arg1 : i32
    %c0_i32 = arith.constant 0 : i32
    %2 = arith.minsi %1, %c0_i32 : i32
    %c0_i32_0 = arith.constant 0 : i32
    %c0_i32_1 = arith.constant 0 : i32
    return %2, %c0_i32_0 : i32, i32
  }
  func.func @transform_1(%arg0: i32, %arg1: i32) -> (i32, i32, i32) {
    %c0_i32 = arith.constant 0 : i32
    %c0_i32_0 = arith.constant 0 : i32
    %c0_i32_1 = arith.constant 0 : i32
    return %arg0, %c0_i32, %c0_i32_0 : i32, i32, i32
  }
}

</mosaic_0001>

<llo_original>
// kernel: tpu_custom_call.1
$region0: #{tpu_custom_call.1}
  #allocation0 [shape = 'u32[]', space=smem, size = 0x4, offset = 0x4, fixed_abs, tag = 'smem constant byte address 0x4 - core index']
  #allocation1 [shape = 'u32[144,128]{1,0:T(1,128)}', space=vmem, size = 0x12000, scoped, tag = 'internal scratch']
  %s0 = inlined_call_operand.hbm [shape: f32[16,128], index: 0, kind: input, shape index: {}]
  %s1 = inlined_call_operand.hbm [shape: f32[2,16,128], index: 1, kind: output, shape index: {}]
  %s2 = sld [smem:[#allocation0]]
  $region49: #{tpu_custom_call.1} parent=0
    _
  %s4 = ssub.s32 1, %s2
  %s5 = scalar_select 0, %s4, %s2
  $region1: #{tpu_custom_call.1} parent=0
    #allocation2 [shape = 'u8[16384]{0}', space=vmem, size = 0x4000, scoped, tag = 'input window, operand 0']
    #allocation3 [shape = 's32[2]{0}', space=sflag, size = 0x8, scoped, tag = 'scoped memory for tpu_custom_call.1']
    #allocation4 [shape = 's32[2]{0}', space=sflag, size = 0x8, scoped, tag = 'scoped memory for tpu_custom_call.1']
    #allocation5 [shape = 'u8[16384]{0}', space=vmem, size = 0x4000, scoped, tag = 'output window, operand 0']
    %6 = vsyncpa [#allocation3], 0
    %s7 = scalar_lea.sflag [#allocation3], 1
    %8 = vsyncpa %s7, 0
    %9 = vsyncpa [#allocation4], 0
    %s10 = scalar_lea.sflag [#allocation4], 1
    %11 = vsyncpa %s10, 0
    loop: start=0, step=1, limit=4
    $region2: #{tpu_custom_call.1} parent=1 // loop_pre_header
      _
    $region3: #{tpu_custom_call.1} parent=1 // loop_header
      %s13 = sphi 0, %s17
      %p14 = scmp.ge.s32.totalorder %s13, 4
      %s20 = sphi 0, %s32
      %s21 = sphi 0, %s28
      %s22 = sphi 0, %s20
      %s23 = sphi 0, %s21
      %s24 = sphi 0, %s22
      %s25 = sphi 0, %s23
      %s41 = sphi 0, %s43
      %s44 = sphi 0, %s41
      %s45 = sphi 0, %s44
      %s61 = sphi 0, %s45
      %s67 = sphi 0, %s69
      %s70 = sphi 0, %s67
      %s71 = sphi 0, %s70
      %s87 = sphi 0, %s71
    $region4: #{tpu_custom_call.1} parent=1 // loop_header_branch
      %16 = sbr.rel (%p14) target = $region8
    $region5: #{tpu_custom_call.1} parent=1 // loop_body
      %s18 = ssub.s32 %s13, 1
      %s19 = ssub.s32 %s13, 2
      %s26 = sadd.s32 1, %s21
      %p27 = scmp.ge.s32.totalorder %s26, 1
      %s28 = scalar_select %p27, 0, %s26
      %s29 = sadd.s32 1, %s20
      %s30 = scalar_select %p27, %s29, %s20
      %p31 = scmp.ge.s32.totalorder %s30, 2
      %s32 = scalar_select %p31, 0, %s30
      %s33 = sadd.s32 %s20, %s21
      %p34 = scmp.lt.s32.totalorder %s33, 0
      %s35 = scalar_select %p34, %s33, 0
      %s36 = sadd.s32 %s32, %s28
      %p37 = scmp.lt.s32.totalorder %s36, 0
      %s38 = scalar_select %p37, %s36, 0
      %s39 = ssub.s32 %s35, %s38
      %p40 = scmp.eq.s32.totalorder %s39, 0
      %s42 = sadd.s32 %s41, 1
      %s43 = scalar_select %p40, %s41, %s42
      %p46 = pneg %p40
      %p47 = scmp.eq.s32.totalorder %s13, 1
      %p48 = por %p46, %p47
      %p49 = scmp.ne.s32.totalorder %s41, %s44
      %p50 = scmp.eq.s32.totalorder %s13, 0
      %p51 = por %p49, %p50
      %p52 = scmp.ne.s32.totalorder %s41, %s44
      %p53 = scmp.eq.s32.totalorder %s18, 1
      %p54 = por %p52, %p53
      %p55 = scmp.ne.s32.totalorder %s44, %s45
      %p56 = scmp.eq.s32.totalorder %s18, 0
      %p57 = por %p55, %p56
      %p58 = scmp.ne.s32.totalorder %s44, %s45
      %p59 = scmp.eq.s32.totalorder %s19, 1
      %p60 = por %p58, %p59
      %p62 = scmp.ne.s32.totalorder %s45, %s61
      %p63 = scmp.eq.s32.totalorder %s19, 0
      %p64 = por %p62, %p63
      %s65 = ssub.s32 %s20, %s32
      %p66 = scmp.eq.s32.totalorder %s65, 0
      %s68 = sadd.s32 %s67, 1
      %s69 = scalar_select %p66, %s67, %s68
      %p72 = pneg %p66
      %p73 = scmp.eq.s32.totalorder %s13, 1
      %p74 = por %p72, %p73
      %p75 = scmp.ne.s32.totalorder %s67, %s70
      %p76 = scmp.eq.s32.totalorder %s13, 0
      %p77 = por %p75, %p76
      %p78 = scmp.ne.s32.totalorder %s67, %s70
      %p79 = scmp.eq.s32.totalorder %s18, 1
      %p80 = por %p78, %p79
      %p81 = scmp.ne.s32.totalorder %s70, %s71
      %p82 = scmp.eq.s32.totalorder %s18, 0
      %p83 = por %p81, %p82
      %p84 = scmp.ne.s32.totalorder %s70, %s71
      %p85 = scmp.eq.s32.totalorder %s19, 1
      %p86 = por %p84, %p85
      %p88 = scmp.ne.s32.totalorder %s71, %s87
      %p89 = scmp.eq.s32.totalorder %s19, 0
      %p90 = por %p88, %p89
      %p91 = scmp.le.s32.totalorder 1, %s13
      %p92 = scmp.lt.s32.totalorder %s13, 3
      %p93 = pnand %p91, %p92
      %p94 = pneg %p93
      // Predicated region
      $region9: #{tpu_custom_call.1} parent=5 // pred_check
        _
      $region10: #{tpu_custom_call.1} parent=5 // pred_check_branch
        %96 = sbr.rel (%p93) target = $region12
      $region11: #{tpu_custom_call.1} parent=5 // pred_region
        %s97 = ssub.s32 %s13, 1
      $region12: #{tpu_custom_call.1} parent=5 // pred_fallthru
        _
      %p98 = scmp.lt.s32.totalorder %s13, 2
      // Predicated region
      $region13: #{tpu_custom_call.1} parent=5 // pred_check
        %p99 = pneg %p98
      $region14: #{tpu_custom_call.1} parent=5 // pred_check_branch
        %101 = sbr.rel (%p99) target = $region16
      $region15: #{tpu_custom_call.1} parent=5 // pred_region
        // Predicated region
        $region17: #{tpu_custom_call.1} parent=15 // pred_check
          %p102 = pneg %p51
        $region18: #{tpu_custom_call.1} parent=15 // pred_check_branch
          %104 = sbr.rel (%p102) target = $region20
        $region19: #{tpu_custom_call.1} parent=15 // pred_region
          %s105 = sand.u32 %s41, 1
          %s106 = scalar_lea.sflag [#allocation3], %s105
          %s107 = sand.u32 %s41, 1
          %s108 = smul.addr %s107, 16
          %s109 = scalar_lea.vmem [#allocation2], %s108
          %s110 = sadd.s32 %s20, %s21
          %p111 = scmp.lt.s32.totalorder %s110, 0
          %s112 = scalar_select %p111, %s110, 0
          %s113 = smul.u32 2, %s112
          %s115 = ssub.s32 256, 256
          %116 = vsyncadd %s106, %s115
          %s117 = smul.addr %s113, 128
          %s118 = scalar_lea.hbm %s0, %s117
          %s119 = sshll.u32 %s109, 4
          %s120 = int_to_ptr.vmem [resolvable:$true] %s119
          %125 = dma.hbm_to_vmem [thread:$0]  %s118, 256, %s120, %s106, 128, 128, 8
        $region20: #{tpu_custom_call.1} parent=15 // pred_fallthru
          _
      $region16: #{tpu_custom_call.1} parent=5 // pred_fallthru
        _
      %p126 = scmp.le.s32.totalorder 1, %s13
      %p127 = scmp.lt.s32.totalorder %s13, 3
      %p128 = pnand %p126, %p127
      %p129 = pneg %p128
      // Predicated region
      $region21: #{tpu_custom_call.1} parent=5 // pred_check
        _
      $region22: #{tpu_custom_call.1} parent=5 // pred_check_branch
        %131 = sbr.rel (%p128) target = $region24
      $region23: #{tpu_custom_call.1} parent=5 // pred_region
        %s132 = ssub.s32 %s13, 1
        %s133 = sand.u32 %s44, 1
        %s134 = scalar_lea.sflag [#allocation3], %s133
        %s135 = sand.u32 %s44, 1
        %s136 = smul.addr %s135, 16
        %s137 = scalar_lea.vmem [#allocation2], %s136
        // Predicated region
        $region25: #{tpu_custom_call.1} parent=23 // pred_check
          %p138 = pneg %p57
        $region26: #{tpu_custom_call.1} parent=23 // pred_check_branch
          %140 = sbr.rel (%p138) target = $region28
        $region27: #{tpu_custom_call.1} parent=23 // pred_region
          %141 = dma.done %s134, 256
        $region28: #{tpu_custom_call.1} parent=23 // pred_fallthru
          _
        %s142 = sand.u32 %s44, 1
        %s143 = scalar_lea.sflag [#allocation3], %s142
        %s144 = sand.u32 %s44, 1
        %s145 = smul.addr %s144, 16
        %s146 = scalar_lea.vmem [#allocation2], %s145
        %p147 = pneg %p57
        %p148 = pneg %p54
        %p149 = pneg %p83
        %p150 = pneg %p80
        %s151 = sand.u32 %s70, 1
        %s152 = scalar_lea.sflag [#allocation4], %s151
        %s153 = sand.u32 %s70, 1
        %s154 = smul.addr %s153, 16
        %s155 = scalar_lea.vmem [#allocation5], %s154
        %s156 = sadd.s32 %s22, %s23
        %p157 = scmp.lt.s32.totalorder %s156, 0
        %s158 = scalar_select %p157, %s156, 0
        %s159 = smul.u32 2, %s158
        %s160 = sadd.s32 %s22, %s23
        %p161 = scmp.eq.s32.totalorder %s23, 0
        // Predicated region
        $region29: #{tpu_custom_call.1} parent=23 // pred_check
          %p162 = pneg %p161
        $region30: #{tpu_custom_call.1} parent=23 // pred_check_branch
          %164 = sbr.rel (%p162) target = $region32
        $region31: #{tpu_custom_call.1} parent=23 // pred_region
          %165 = vst [vmem:[%s155] sm:$0xff] 0.0
          %166 = vst [vmem:[%s155 + $0x8] sm:$0xff] 0.0
        $region32: #{tpu_custom_call.1} parent=23 // pred_fallthru
          _
        %p167 = scmp.lt.s32.totalorder %s160, 1
        // Predicated region
        $region33: #{tpu_custom_call.1} parent=23 // pred_check
          %p168 = pneg %p167
        $region34: #{tpu_custom_call.1} parent=23 // pred_check_branch
          %170 = sbr.rel (%p168) target = $region36
        $region35: #{tpu_custom_call.1} parent=23 // pred_region
          %v171 = vld [vmem:[%s137] sm:$0xff]
          %v172 = vld [vmem:[%s137 + $0x8] sm:$0xff]
          %v173 = vand.u32 2147483647, %v171
          %v174 = vand.u32 2147483647, %v172
          %v175 = vld [vmem:[%s155] sm:$0xff]
          %v176 = vld [vmem:[%s155 + $0x8] sm:$0xff]
          %v177 = vadd.f32 %v173, 0.0
          %v178 = vadd.f32 %v174, 0.0
          %v179 = vadd.f32 %v175, %v177
          %v180 = vadd.f32 %v176, %v178
          %181 = vst [vmem:[%s155] sm:$0xff] %v179
          %182 = vst [vmem:[%s155 + $0x8] sm:$0xff] %v180
        $region36: #{tpu_custom_call.1} parent=23 // pred_fallthru
          _
        %s183 = sand.u32 %s70, 1
        %s184 = scalar_lea.sflag [#allocation4], %s183
        %s185 = sand.u32 %s70, 1
        %s186 = smul.addr %s185, 16
        %s187 = scalar_lea.vmem [#allocation5], %s186
        // Predicated region
        $region37: #{tpu_custom_call.1} parent=23 // pred_check
          %p188 = pneg %p80
        $region38: #{tpu_custom_call.1} parent=23 // pred_check_branch
          %190 = sbr.rel (%p188) target = $region40
        $region39: #{tpu_custom_call.1} parent=23 // pred_region
          %s192 = ssub.s32 256, 256
          %193 = vsyncadd %s184, %s192
          %s194 = smul.addr %s22, 2
          %s195 = smul.addr %s194, 128
          %s196 = scalar_lea.hbm %s1, %s195
          %s197 = sshll.u32 %s187, 4
          %s198 = int_to_ptr.vmem [resolvable:$true] %s197
          %203 = dma.vmem_to_hbm [thread:$0]  %s198, 256, %s196, %s184, 128, 128, 8
        $region40: #{tpu_custom_call.1} parent=23 // pred_fallthru
          _
      $region24: #{tpu_custom_call.1} parent=5 // pred_fallthru
        _
      %p204 = scmp.le.s32.totalorder 2, %s13
      // Predicated region
      $region41: #{tpu_custom_call.1} parent=5 // pred_check
        %p205 = pneg %p204
      $region42: #{tpu_custom_call.1} parent=5 // pred_check_branch
        %207 = sbr.rel (%p205) target = $region44
      $region43: #{tpu_custom_call.1} parent=5 // pred_region
        %s208 = ssub.s32 %s13, 2
        // Predicated region
        $region45: #{tpu_custom_call.1} parent=43 // pred_check
          %p209 = pneg %p86
        $region46: #{tpu_custom_call.1} parent=43 // pred_check_branch
          %211 = sbr.rel (%p209) target = $region48
        $region47: #{tpu_custom_call.1} parent=43 // pred_region
          %s212 = sand.u32 %s71, 1
          %s213 = scalar_lea.sflag [#allocation4], %s212
          %s214 = sand.u32 %s71, 1
          %s215 = smul.addr %s214, 16
          %s216 = scalar_lea.vmem [#allocation5], %s215
          %217 = dma.done %s213, 256
        $region48: #{tpu_custom_call.1} parent=43 // pred_fallthru
          _
      $region44: #{tpu_custom_call.1} parent=5 // pred_fallthru
        _
    $region6: #{tpu_custom_call.1} parent=1 // loop_footer
      %s17 = sadd.s32 1, %s13
    $region7: #{tpu_custom_call.1} parent=1 // loop_footer_branch
      %12 = sbr.rel target = $region3
    $region8: #{tpu_custom_call.1} parent=1 // loop_exit
      _
    %218 = vsyncpa [#allocation3], 1
    %s219 = scalar_lea.sflag [#allocation3], 1
    %220 = vsyncpa %s219, 1
    %221 = vsyncpa [#allocation4], 1
    %s222 = scalar_lea.sflag [#allocation4], 1
    %223 = vsyncpa %s222, 1

</llo_original>
